<compile_context>
chip_gen: v7x
topology: tpu7x:2x2x1
jax: 0.10.0
libtpu: 0.0.40
codegen_flags: <defaults>
</compile_context>

<pallas_src>
import functools

import jax
import jax.numpy as jnp
from jax.experimental import pallas as pl
from jax.experimental.pallas import tpu as pltpu


def _cdiv(a, b):
    return -(-a // b)


@functools.lru_cache(maxsize=None)
def _tpu_block_config():
    """Generation-aware (input block bytes, vmem_limit_bytes or None)."""
    try:
        kind = jax.devices()[0].device_kind.lower()
    except Exception:  # pragma: no cover - defensive fallback
        kind = ""
    if "v6" in kind:                       # v6e: 1.4 TB/s HBM, 128 MiB VMEM
        return 4 * 1024 * 1024, 32 * 1024 * 1024
    if "v7" in kind or "tpu7" in kind:     # v7x: 3.2 TB/s HBM, 64 MiB VMEM
        return 8 * 1024 * 1024, 40 * 1024 * 1024
    # v5e (16 MiB scoped default) and anything unknown: conservative.
    return 2 * 1024 * 1024, None


def _ipow(x, p):
    """x**p via repeated multiplies for small integer p (stays on the VPU)."""
    if isinstance(p, int) and 1 <= p <= 8:
        r = x
        for _ in range(p - 1):
            r = r * x
        return r
    return x ** p  # non-integer p: EUP exp/log path


# ---------------------------------------------------------------------------
# Packed path: L % 128 == 0.  Inputs viewed as [N, R, 128].
# Grid (n, n_split, blocks_per_split); outputs lane-partial num/den per
# (sample, split); the tiny combine + divide happens in the wrapper.
# ---------------------------------------------------------------------------
def _dice_kernel_packed(p_ref, t_ref, num_out, den_out, num_acc, den_acc, *,
                        p_exp, bps, total_blocks, rows_in_last,
                        tail_ragged, has_skip):
    j = pl.program_id(2)

    @pl.when(j == 0)
    def _():
        num_acc[...] = jnp.zeros_like(num_acc)
        den_acc[...] = jnp.zeros_like(den_acc)

    pred = p_ref[0].astype(jnp.float32)   # (tile_r, 128), cast in-kernel
    targ = t_ref[0].astype(jnp.float32)

    gb = pl.program_id(1) * bps + j       # global block index along R

    def _accumulate(pv, tv):
        # Lane-wide partial sums (sublane reduce is VPU adds); cross-lane
        # reduce is deferred to the wrapper on a tiny array.
        num_acc[...] += jnp.sum(pv * tv, axis=0, keepdims=True)
        den_acc[...] += jnp.sum(_ipow(pv, p_exp) + _ipow(tv, p_exp),
                                axis=0, keepdims=True)

    if tail_ragged:
        # Only the final real block is ragged: full-rate path everywhere else.
        @pl.when(gb < total_blocks - 1)
        def _():
            _accumulate(pred, targ)

        @pl.when(gb == total_blocks - 1)
        def _():
            row = jax.lax.broadcasted_iota(jnp.int32, pred.shape, 0)
            valid = row < rows_in_last
            _accumulate(jnp.where(valid, pred, 0.0),
                        jnp.where(valid, targ, 0.0))
    elif has_skip:
        # Split over-covers R by whole blocks: skip the duplicated block(s).
        @pl.when(gb < total_blocks)
        def _():
            _accumulate(pred, targ)
    else:
        _accumulate(pred, targ)

    @pl.when(j == bps - 1)
    def _():
        num_out[...] = num_acc[...].reshape(num_out.shape)
        den_out[...] = den_acc[...].reshape(den_out.shape)


def _per_sample_sums_packed(pred2, targ2, p_exp, block_bytes, vmem_limit):
    n, L = pred2.shape
    R = L // 128
    itemsize = jnp.dtype(pred2.dtype).itemsize
    sub = max(8, 32 // itemsize)                       # dtype sublane multiple
    max_tile_r = max(sub, (block_bytes // (128 * itemsize)) // sub * sub)

    tile_r = R if R <= max_tile_r else max_tile_r
    total_blocks = _cdiv(R, tile_r)
    rows_in_last = R - (total_blocks - 1) * tile_r
    tail_ragged = rows_in_last != tile_r

    # v7x has 2 TensorCores: with a single sample, split the row-block range
    # into two "parallel" halves so both cores stream half the data.
    n_split = 2 if (n == 1 and total_blocks >= 2) else 1
    bps = _cdiv(total_blocks, n_split)                 # blocks per split
    has_skip = n_split * bps > total_blocks
    last_blk = total_blocks - 1

    pred3 = pred2.reshape(n, R, 128)   # contiguous reshape -> free
    targ3 = targ2.reshape(n, R, 128)

    if n_split == 1:
        in_map = lambda i, s, j: (i, j, 0)
    else:
        # Clamp so no DMA is fully out of bounds; duplicated block's compute
        # is gated off in-kernel via `has_skip`.
        in_map = lambda i, s, j: (i, jnp.minimum(s * bps + j, last_blk), 0)

    kernel = functools.partial(
        _dice_kernel_packed, p_exp=p_exp, bps=bps, total_blocks=total_blocks,
        rows_in_last=rows_in_last, tail_ragged=tail_ragged, has_skip=has_skip)

    transc = 0 if isinstance(p_exp, int) else 4 * n * L
    cost = pl.CostEstimate(
        flops=6 * n * L, transcendentals=transc,
        bytes_accessed=2 * n * L * itemsize + 2 * n * n_split * 128 * 4)

    part_shape = jax.ShapeDtypeStruct((n, n_split, 1, 128), jnp.float32)
    num_parts, den_parts = pl.pallas_call(
        kernel,
        out_shape=(part_shape, part_shape),
        grid_spec=pltpu.PrefetchScalarGridSpec(
            num_scalar_prefetch=0,
            grid=(n, n_split, bps),
            in_specs=[
                pl.BlockSpec((1, tile_r, 128), in_map),
                pl.BlockSpec((1, tile_r, 128), in_map),
            ],
            out_specs=[
                pl.BlockSpec((1, 1, 1, 128), lambda i, s, j: (i, s, 0, 0)),
                pl.BlockSpec((1, 1, 1, 128), lambda i, s, j: (i, s, 0, 0)),
            ],
            scratch_shapes=[
                pltpu.VMEM((1, 128), jnp.float32),
                pltpu.VMEM((1, 128), jnp.float32),
            ],
        ),
        compiler_params=pltpu.CompilerParams(
            dimension_semantics=("parallel", "parallel", "arbitrary"),
            vmem_limit_bytes=vmem_limit),
        cost_estimate=cost,
    )(pred3, targ3)

    num = jnp.sum(num_parts, axis=(1, 2, 3))   # combine splits + lanes (tiny)
    den = jnp.sum(den_parts, axis=(1, 2, 3))
    return num, den


# ---------------------------------------------------------------------------
# Fallback path: general L.  Inputs stay [N, L]; 2-D grid over (n, L) so the
# per-input block stays bounded for any batch size; lane mask on last L-tile.
# ---------------------------------------------------------------------------
def _dice_kernel_flat(p_ref, t_ref, o_ref, num_acc, den_acc, *,
                      smooth, p_exp, cols_in_last, need_mask):
    j = pl.program_id(1)
    last = pl.num_programs(1) - 1

    @pl.when(j == 0)
    def _():
        num_acc[...] = jnp.zeros_like(num_acc)
        den_acc[...] = jnp.zeros_like(den_acc)

    pred = p_ref[...].astype(jnp.float32)   # (tile_n, tile_l)
    targ = t_ref[...].astype(jnp.float32)

    def _accumulate(pv, tv):
        num_acc[...] += jnp.sum(pv * tv, axis=1, keepdims=True)
        den_acc[...] += jnp.sum(_ipow(pv, p_exp) + _ipow(tv, p_exp),
                                axis=1, keepdims=True)

    if need_mask:
        @pl.when(j != last)
        def _():
            _accumulate(pred, targ)

        @pl.when(j == last)
        def _():
            col = jax.lax.broadcasted_iota(jnp.int32, pred.shape, 1)
            valid = col < cols_in_last
            _accumulate(jnp.where(valid, pred, 0.0),
                        jnp.where(valid, targ, 0.0))
    else:
        _accumulate(pred, targ)

    @pl.when(j == last)
    def _():
        num = num_acc[...] + smooth
        den = den_acc[...] + smooth
        o_ref[...] = (1.0 - num / den).astype(o_ref.dtype)


def _per_sample_dice_flat(pred2, targ2, smooth, p_exp, block_bytes, vmem_limit):
    n, L = pred2.shape
    itemsize = jnp.dtype(pred2.dtype).itemsize

    row_mult = max(8, 32 // itemsize)
    L_up = _cdiv(L, 128) * 128
    if n <= row_mult:
        tile_n = n                         # full batch dim (allowed block dim)
    else:
        rows_fit = max(row_mult,
                       (block_bytes // max(L_up * itemsize, 1))
                       // row_mult * row_mult)
        tile_n = min(rows_fit, (n // row_mult) * row_mult)
    cols_fit = max(128, (block_bytes // (tile_n * itemsize)) // 128 * 128)
    tile_l = min(cols_fit, L_up)

    grid_n = _cdiv(n, tile_n)
    grid_l = _cdiv(L, tile_l)
    cols_in_last = L - (grid_l - 1) * tile_l
    need_mask = cols_in_last != tile_l

    kernel = functools.partial(
        _dice_kernel_flat, smooth=float(smooth), p_exp=p_exp,
        cols_in_last=cols_in_last, need_mask=need_mask)

    transc = 0 if isinstance(p_exp, int) else 4 * n * L
    cost = pl.CostEstimate(flops=6 * n * L, transcendentals=transc,
                           bytes_accessed=2 * n * L * itemsize + n * 4)

    out = pl.pallas_call(
        kernel,
        out_shape=jax.ShapeDtypeStruct((n, 1), jnp.float32),
        grid_spec=pltpu.PrefetchScalarGridSpec(
            num_scalar_prefetch=0,
            grid=(grid_n, grid_l),
            in_specs=[
                pl.BlockSpec((tile_n, tile_l), lambda i, j: (i, j)),
                pl.BlockSpec((tile_n, tile_l), lambda i, j: (i, j)),
            ],
            out_specs=pl.BlockSpec((tile_n, 1), lambda i, j: (i, 0)),
            scratch_shapes=[
                pltpu.VMEM((tile_n, 1), jnp.float32),
                pltpu.VMEM((tile_n, 1), jnp.float32),
            ],
        ),
        compiler_params=pltpu.CompilerParams(
            dimension_semantics=("parallel", "arbitrary"),
            vmem_limit_bytes=vmem_limit),
        cost_estimate=cost,
    )(pred2, targ2)
    return out[:, 0]


# ---------------------------------------------------------------------------
# Public wrapper (matches BinaryDiceLoss.forward semantics).
# ---------------------------------------------------------------------------
def binary_dice_loss(predict, target, *, smooth=1.0, p=2, reduction="mean"):
    assert predict.shape[0] == target.shape[0], \
        "predict & target batch size don't match"
    n = predict.shape[0]
    pred2 = predict.reshape(n, -1)   # native dtype, free contiguous reshape
    targ2 = target.reshape(n, -1)
    L = pred2.shape[1]

    block_bytes, vmem_limit = _tpu_block_config()

    if L == 0:
        loss = jnp.zeros((n,), jnp.float32)
    elif L % 128 == 0:
        num, den = _per_sample_sums_packed(pred2, targ2, p,
                                           block_bytes, vmem_limit)
        # Matches the PyTorch spec exactly: num = sum(x*y) + smooth (no 2x).
        loss = 1.0 - (num + smooth) / (den + smooth)
    else:
        loss = _per_sample_dice_flat(pred2, targ2, smooth, p,
                                     block_bytes, vmem_limit)

    if reduction == "mean":
        return jnp.mean(loss)
    elif reduction == "sum":
        return jnp.sum(loss)
    elif reduction == "none":
        return loss
    else:
        raise Exception("Unexpected reduction {}".format(reduction))


if __name__ == "__main__":
    key = jax.random.PRNGKey(0)
    k1, k2, k3, k4, k5, k6 = jax.random.split(key, 6)

    # Case 1: NCHW with L % 128 == 0 (packed path), p=2, 'mean'.
    N, C, H, W = 2, 4, 16, 16
    predict = jax.nn.sigmoid(jax.random.normal(k1, (N, C, H, W), jnp.float32))
    target = (jax.random.uniform(k2, (N, C, H, W)) > 0.5).astype(jnp.float32)

    out = binary_dice_loss(predict, target, smooth=1.0, p=2, reduction="mean")
    out = jax.block_until_ready(out)

    p2 = predict.reshape(N, -1)
    t2 = target.reshape(N, -1)
    num = jnp.sum(p2 * t2, axis=1) + 1.0
    den = jnp.sum(p2 ** 2 + t2 ** 2, axis=1) + 1.0
    ref = jnp.mean(1.0 - num / den)
    assert jnp.allclose(out, ref, rtol=1e-5, atol=1e-5), (out, ref)

    # Case 2: ragged L (L % 128 != 0 -> flat masked path), 'none'.
    N2, C2, H2, W2 = 2, 3, 15, 15
    predict2 = jax.nn.sigmoid(jax.random.normal(k3, (N2, C2, H2, W2), jnp.float32))
    target2 = (jax.random.uniform(k4, (N2, C2, H2, W2)) > 0.5).astype(jnp.float32)

    out2 = binary_dice_loss(predict2, target2, smooth=1.0, p=2, reduction="none")
    out2 = jax.block_until_ready(out2)

    p22 = predict2.reshape(N2, -1)
    t22 = target2.reshape(N2, -1)
    num2 = jnp.sum(p22 * t22, axis=1) + 1.0
    den2 = jnp.sum(p22 ** 2 + t22 ** 2, axis=1) + 1.0
    ref2 = 1.0 - num2 / den2
    assert jnp.allclose(out2, ref2, rtol=1e-5, atol=1e-5), (out2, ref2)

    # Case 3: p=3 (repeated-multiply denominator), 'sum'.
    out3 = binary_dice_loss(predict, target, smooth=1.0, p=3, reduction="sum")
    out3 = jax.block_until_ready(out3)
    num3 = jnp.sum(p2 * t2, axis=1) + 1.0
    den3 = jnp.sum(p2 ** 3 + t2 ** 3, axis=1) + 1.0
    ref3 = jnp.sum(1.0 - num3 / den3)
    assert jnp.allclose(out3, ref3, rtol=1e-5, atol=1e-5), (out3, ref3)

    # Case 4: single-sample, multi-block packed path (exercises the R-split
    # across "parallel" grid entries on multi-block configs), 'none'.
    N4, C4, H4, W4 = 1, 8, 384, 512
    predict4 = jax.nn.sigmoid(jax.random.normal(k5, (N4, C4, H4, W4), jnp.float32))
    target4 = (jax.random.uniform(k6, (N4, C4, H4, W4)) > 0.5).astype(jnp.float32)

    out4 = binary_dice_loss(predict4, target4, smooth=1.0, p=2, reduction="none")
    out4 = jax.block_until_ready(out4)

    p42 = predict4.reshape(N4, -1)
    t42 = target4.reshape(N4, -1)
    num4 = jnp.sum(p42 * t42, axis=1) + 1.0
    den4 = jnp.sum(p42 ** 2 + t42 ** 2, axis=1) + 1.0
    ref4 = 1.0 - num4 / den4
    assert jnp.allclose(out4, ref4, rtol=1e-4, atol=1e-4), (out4, ref4)

    print("KERNEL_OK")
</pallas_src>

<mosaic_0001>
module attributes {stable_mosaic.version = 11 : i64} {
  func.func @_dice_kernel_packed(%arg0: i32, %arg1: i32, %arg2: i32, %arg3: memref<1x8x128xf32, #tpu.memory_space<vmem>>, %arg4: memref<1x8x128xf32, #tpu.memory_space<vmem>>, %arg5: memref<1x1x1x128xf32, #tpu.memory_space<vmem>>, %arg6: memref<1x1x1x128xf32, #tpu.memory_space<vmem>>, %arg7: memref<1x128xf32, #tpu.memory_space<vmem>>, %arg8: memref<1x128xf32, #tpu.memory_space<vmem>>) attributes {dimension_semantics = [#tpu.dimension_semantics<parallel>, #tpu.dimension_semantics<parallel>, #tpu.dimension_semantics<arbitrary>], iteration_bounds = array<i64: 2, 1, 1>, scalar_prefetch = 0 : i64, scratch_operands = 2 : i64, tpu.core_type = #tpu.core_type<tc>, window_params = [{transform_indices = @transform_0, window_bounds = array<i64: 1, 8, 128>}, {transform_indices = @transform_1, window_bounds = array<i64: 1, 8, 128>}, {transform_indices = @transform_2, window_bounds = array<i64: 1, 1, 1, 128>}, {transform_indices = @transform_3, window_bounds = array<i64: 1, 1, 1, 128>}]} {
    %c0_i32 = arith.constant 0 : i32
    %0 = arith.cmpi eq, %arg2, %c0_i32 : i32
    %1 = arith.extui %0 : i1 to i32
    %c0_i32_0 = arith.constant 0 : i32
    %2 = arith.cmpi ne, %1, %c0_i32_0 : i32
    scf.if %2 {
      %cst_17 = arith.constant 0.000000e+00 : f32
      %24 = vector.broadcast %cst_17 : f32 to vector<1x128xf32>
      %c0_18 = arith.constant 0 : index
      %c0_19 = arith.constant 0 : index
      %25 = vector.load %arg7[%c0_18, %c0_19] : memref<1x128xf32, #tpu.memory_space<vmem>>, vector<1x128xf32>
      tpu.vector_store %arg7[%c0_18, %c0_19], %24 {strides = array<i32>} : memref<1x128xf32, #tpu.memory_space<vmem>>, vector<1x128xf32>,
      %cst_20 = arith.constant 0.000000e+00 : f32
      %26 = vector.broadcast %cst_20 : f32 to vector<1x128xf32>
      %c0_21 = arith.constant 0 : index
      %c0_22 = arith.constant 0 : index
      %27 = vector.load %arg8[%c0_21, %c0_22] : memref<1x128xf32, #tpu.memory_space<vmem>>, vector<1x128xf32>
      tpu.vector_store %arg8[%c0_21, %c0_22], %26 {strides = array<i32>} : memref<1x128xf32, #tpu.memory_space<vmem>>, vector<1x128xf32>,
    } else {
    }
    %c0 = arith.constant 0 : index
    %c0_1 = arith.constant 0 : index
    %c0_2 = arith.constant 0 : index
    %3 = vector.load %arg3[%c0, %c0_1, %c0_2] : memref<1x8x128xf32, #tpu.memory_space<vmem>>, vector<1x8x128xf32>
    %4 = vector.shape_cast %3 : vector<1x8x128xf32> to vector<8x128xf32>
    %c0_3 = arith.constant 0 : index
    %c0_4 = arith.constant 0 : index
    %c0_5 = arith.constant 0 : index
    %5 = vector.load %arg4[%c0_3, %c0_4, %c0_5] : memref<1x8x128xf32, #tpu.memory_space<vmem>>, vector<1x8x128xf32>
    %6 = vector.shape_cast %5 : vector<1x8x128xf32> to vector<8x128xf32>
    %c0_6 = arith.constant 0 : index
    %c0_7 = arith.constant 0 : index
    %7 = vector.load %arg7[%c0_6, %c0_7] : memref<1x128xf32, #tpu.memory_space<vmem>>, vector<1x128xf32>
    %8 = arith.mulf %4, %6 : vector<8x128xf32>
    %cst = arith.constant dense<0.000000e+00> : vector<128xf32>
    %9 = vector.multi_reduction <add>, %8, %cst [0] : vector<8x128xf32> to vector<128xf32>
    %10 = vector.shape_cast %9 : vector<128xf32> to vector<1x128xf32>
    %11 = arith.addf %7, %10 : vector<1x128xf32>
    %c0_8 = arith.constant 0 : index
    %c0_9 = arith.constant 0 : index
    %12 = vector.load %arg7[%c0_8, %c0_9] : memref<1x128xf32, #tpu.memory_space<vmem>>, vector<1x128xf32>
    tpu.vector_store %arg7[%c0_8, %c0_9], %11 {strides = array<i32>} : memref<1x128xf32, #tpu.memory_space<vmem>>, vector<1x128xf32>,
    %c0_10 = arith.constant 0 : index
    %c0_11 = arith.constant 0 : index
    %13 = vector.load %arg8[%c0_10, %c0_11] : memref<1x128xf32, #tpu.memory_space<vmem>>, vector<1x128xf32>
    %14 = arith.mulf %4, %4 : vector<8x128xf32>
    %15 = arith.mulf %6, %6 : vector<8x128xf32>
    %16 = arith.addf %14, %15 : vector<8x128xf32>
    %cst_12 = arith.constant dense<0.000000e+00> : vector<128xf32>
    %17 = vector.multi_reduction <add>, %16, %cst_12 [0] : vector<8x128xf32> to vector<128xf32>
    %18 = vector.shape_cast %17 : vector<128xf32> to vector<1x128xf32>
    %19 = arith.addf %13, %18 : vector<1x128xf32>
    %c0_13 = arith.constant 0 : index
    %c0_14 = arith.constant 0 : index
    %20 = vector.load %arg8[%c0_13, %c0_14] : memref<1x128xf32, #tpu.memory_space<vmem>>, vector<1x128xf32>
    tpu.vector_store %arg8[%c0_13, %c0_14], %19 {strides = array<i32>} : memref<1x128xf32, #tpu.memory_space<vmem>>, vector<1x128xf32>,
    %c0_i32_15 = arith.constant 0 : i32
    %21 = arith.cmpi eq, %arg2, %c0_i32_15 : i32
    %22 = arith.extui %21 : i1 to i32
    %c0_i32_16 = arith.constant 0 : i32
    %23 = arith.cmpi ne, %22, %c0_i32_16 : i32
    scf.if %23 {
      %c0_17 = arith.constant 0 : index
      %c0_18 = arith.constant 0 : index
      %24 = vector.load %arg7[%c0_17, %c0_18] : memref<1x128xf32, #tpu.memory_space<vmem>>, vector<1x128xf32>
      %25 = vector.shape_cast %24 : vector<1x128xf32> to vector<1x1x1x128xf32>
      %c0_19 = arith.constant 0 : index
      %c0_20 = arith.constant 0 : index
      %c0_21 = arith.constant 0 : index
      %c0_22 = arith.constant 0 : index
      %26 = vector.load %arg5[%c0_19, %c0_20, %c0_21, %c0_22] : memref<1x1x1x128xf32, #tpu.memory_space<vmem>>, vector<1x1x1x128xf32>
      tpu.vector_store %arg5[%c0_19, %c0_20, %c0_21, %c0_22], %25 {strides = array<i32>} : memref<1x1x1x128xf32, #tpu.memory_space<vmem>>, vector<1x1x1x128xf32>,
      %c0_23 = arith.constant 0 : index
      %c0_24 = arith.constant 0 : index
      %27 = vector.load %arg8[%c0_23, %c0_24] : memref<1x128xf32, #tpu.memory_space<vmem>>, vector<1x128xf32>
      %28 = vector.shape_cast %27 : vector<1x128xf32> to vector<1x1x1x128xf32>
      %c0_25 = arith.constant 0 : index
      %c0_26 = arith.constant 0 : index
      %c0_27 = arith.constant 0 : index
      %c0_28 = arith.constant 0 : index
      %29 = vector.load %arg6[%c0_25, %c0_26, %c0_27, %c0_28] : memref<1x1x1x128xf32, #tpu.memory_space<vmem>>, vector<1x1x1x128xf32>
      tpu.vector_store %arg6[%c0_25, %c0_26, %c0_27, %c0_28], %28 {strides = array<i32>} : memref<1x1x1x128xf32, #tpu.memory_space<vmem>>, vector<1x1x1x128xf32>,
    } else {
    }
    return
  }
  func.func @transform_0(%arg0: i32, %arg1: i32, %arg2: i32) -> (i32, i32, i32) {
    %c0_i32 = arith.constant 0 : i32
    %c0_i32_0 = arith.constant 0 : i32
    return %arg0, %arg2, %c0_i32 : i32, i32, i32
  }
  func.func @transform_1(%arg0: i32, %arg1: i32, %arg2: i32) -> (i32, i32, i32) {
    %c0_i32 = arith.constant 0 : i32
    %c0_i32_0 = arith.constant 0 : i32
    return %arg0, %arg2, %c0_i32 : i32, i32, i32
  }
  func.func @transform_2(%arg0: i32, %arg1: i32, %arg2: i32) -> (i32, i32, i32, i32) {
    %c0_i32 = arith.constant 0 : i32
    %c0_i32_0 = arith.constant 0 : i32
    %c0_i32_1 = arith.constant 0 : i32
    return %arg0, %arg1, %c0_i32, %c0_i32_0 : i32, i32, i32, i32
  }
  func.func @transform_3(%arg0: i32, %arg1: i32, %arg2: i32) -> (i32, i32, i32, i32) {
    %c0_i32 = arith.constant 0 : i32
    %c0_i32_0 = arith.constant 0 : i32
    %c0_i32_1 = arith.constant 0 : i32
    return %arg0, %arg1, %c0_i32, %c0_i32_0 : i32, i32, i32, i32
  }
}

</mosaic_0001>

<llo_original>
// kernel: tpu_custom_call.1
$region0: #{tpu_custom_call.1}
  #allocation0 [shape = 'u32[]', space=smem, size = 0x4, offset = 0x4, fixed_abs, tag = 'smem constant byte address 0x4 - core index']
  #allocation1 [shape = 'u32[144,128]{1,0:T(1,128)}', space=vmem, size = 0x12000, scoped, tag = 'internal scratch']
  #allocation2 [shape = 'f32[1,128]{1,0:T(1,128)}', space=vmem, size = 0x200, scoped, tag = 'scratch operand']
  #allocation3 [shape = 'f32[1,128]{1,0:T(1,128)}', space=vmem, size = 0x200, scoped, tag = 'scratch operand']
  %s0 = inlined_call_operand.hbm [shape: f32[2,8,128], index: 0, kind: input, shape index: {}]
  %s1 = inlined_call_operand.hbm [shape: f32[2,8,128], index: 1, kind: input, shape index: {}]
  %s2 = inlined_call_operand.hbm [shape: f32[2,1,1,128], index: 2, kind: output, shape index: {0}]
  %s3 = inlined_call_operand.hbm [shape: f32[2,1,1,128], index: 3, kind: output, shape index: {1}]
  %4 = xla_tuple %s2, %s3
  %s5 = sld [smem:[#allocation0]]
  $region65: #{tpu_custom_call.1} parent=0
    _
  %s7 = ssub.s32 1, %s5
  %s8 = scalar_select 0, %s7, %s5
  $region1: #{tpu_custom_call.1} parent=0
    #allocation4 [shape = 'u8[8192]{0}', space=vmem, size = 0x2000, scoped, tag = 'input window, operand 0']
    #allocation5 [shape = 's32[2]{0}', space=sflag, size = 0x8, scoped, tag = 'scoped memory for tpu_custom_call.1']
    #allocation6 [shape = 's32[2]{0}', space=sflag, size = 0x8, scoped, tag = 'scoped memory for tpu_custom_call.1']
    #allocation7 [shape = 'u8[8192]{0}', space=vmem, size = 0x2000, scoped, tag = 'input window, operand 1']
    #allocation8 [shape = 's32[2]{0}', space=sflag, size = 0x8, scoped, tag = 'scoped memory for tpu_custom_call.1']
    #allocation9 [shape = 'u8[1024]{0}', space=vmem, size = 0x400, scoped, tag = 'output window, operand 0']
    #allocation10 [shape = 'u8[1024]{0}', space=vmem, size = 0x400, scoped, tag = 'output window, operand 1']
    #allocation11 [shape = 's32[2]{0}', space=sflag, size = 0x8, scoped, tag = 'scoped memory for tpu_custom_call.1']
    %9 = vsyncpa [#allocation5], 0
    %s10 = scalar_lea.sflag [#allocation5], 1
    %11 = vsyncpa %s10, 0
    %12 = vsyncpa [#allocation8], 0
    %s13 = scalar_lea.sflag [#allocation8], 1
    %14 = vsyncpa %s13, 0
    %15 = vsyncpa [#allocation6], 0
    %s16 = scalar_lea.sflag [#allocation6], 1
    %17 = vsyncpa %s16, 0
    %18 = vsyncpa [#allocation11], 0
    %s19 = scalar_lea.sflag [#allocation11], 1
    %20 = vsyncpa %s19, 0
    loop: start=0, step=1, limit=4
    $region2: #{tpu_custom_call.1} parent=1 // loop_pre_header
      _
    $region3: #{tpu_custom_call.1} parent=1 // loop_header
      %s22 = sphi 0, %s26
      %p23 = scmp.ge.s32.totalorder %s22, 4
      %s29 = sphi 0, %s48
      %s30 = sphi 0, %s44
      %s31 = sphi 0, %s40
      %s32 = sphi 0, %s29
      %s33 = sphi 0, %s30
      %s34 = sphi 0, %s31
      %s35 = sphi 0, %s32
      %s36 = sphi 0, %s33
      %s37 = sphi 0, %s34
      %s53 = sphi 0, %s55
      %s56 = sphi 0, %s53
      %s57 = sphi 0, %s56
      %s73 = sphi 0, %s57
      %s81 = sphi 0, %s83
      %s84 = sphi 0, %s81
      %s85 = sphi 0, %s84
      %s101 = sphi 0, %s85
      %s109 = sphi 0, %s111
      %s112 = sphi 0, %s109
      %s113 = sphi 0, %s112
      %s129 = sphi 0, %s113
      %s137 = sphi 0, %s139
      %s140 = sphi 0, %s137
      %s141 = sphi 0, %s140
      %s157 = sphi 0, %s141
    $region4: #{tpu_custom_call.1} parent=1 // loop_header_branch
      %25 = sbr.rel (%p23) target = $region8
    $region5: #{tpu_custom_call.1} parent=1 // loop_body
      %s27 = ssub.s32 %s22, 1
      %s28 = ssub.s32 %s22, 2
      %s38 = sadd.s32 1, %s31
      %p39 = scmp.ge.s32.totalorder %s38, 1
      %s40 = scalar_select %p39, 0, %s38
      %s41 = sadd.s32 1, %s30
      %s42 = scalar_select %p39, %s41, %s30
      %p43 = scmp.ge.s32.totalorder %s42, 1
      %s44 = scalar_select %p43, 0, %s42
      %s45 = sadd.s32 1, %s29
      %s46 = scalar_select %p43, %s45, %s29
      %p47 = scmp.ge.s32.totalorder %s46, 2
      %s48 = scalar_select %p47, 0, %s46
      %s49 = ssub.s32 %s29, %s48
      %s50 = ssub.s32 %s31, %s40
      %s51 = sor.u32 %s49, %s50
      %p52 = scmp.eq.s32.totalorder %s51, 0
      %s54 = sadd.s32 %s53, 1
      %s55 = scalar_select %p52, %s53, %s54
      %p58 = pneg %p52
      %p59 = scmp.eq.s32.totalorder %s22, 1
      %p60 = por %p58, %p59
      %p61 = scmp.ne.s32.totalorder %s53, %s56
      %p62 = scmp.eq.s32.totalorder %s22, 0
      %p63 = por %p61, %p62
      %p64 = scmp.ne.s32.totalorder %s53, %s56
      %p65 = scmp.eq.s32.totalorder %s27, 1
      %p66 = por %p64, %p65
      %p67 = scmp.ne.s32.totalorder %s56, %s57
      %p68 = scmp.eq.s32.totalorder %s27, 0
      %p69 = por %p67, %p68
      %p70 = scmp.ne.s32.totalorder %s56, %s57
      %p71 = scmp.eq.s32.totalorder %s28, 1
      %p72 = por %p70, %p71
      %p74 = scmp.ne.s32.totalorder %s57, %s73
      %p75 = scmp.eq.s32.totalorder %s28, 0
      %p76 = por %p74, %p75
      %s77 = ssub.s32 %s29, %s48
      %s78 = ssub.s32 %s31, %s40
      %s79 = sor.u32 %s77, %s78
      %p80 = scmp.eq.s32.totalorder %s79, 0
      %s82 = sadd.s32 %s81, 1
      %s83 = scalar_select %p80, %s81, %s82
      %p86 = pneg %p80
      %p87 = scmp.eq.s32.totalorder %s22, 1
      %p88 = por %p86, %p87
      %p89 = scmp.ne.s32.totalorder %s81, %s84
      %p90 = scmp.eq.s32.totalorder %s22, 0
      %p91 = por %p89, %p90
      %p92 = scmp.ne.s32.totalorder %s81, %s84
      %p93 = scmp.eq.s32.totalorder %s27, 1
      %p94 = por %p92, %p93
      %p95 = scmp.ne.s32.totalorder %s84, %s85
      %p96 = scmp.eq.s32.totalorder %s27, 0
      %p97 = por %p95, %p96
      %p98 = scmp.ne.s32.totalorder %s84, %s85
      %p99 = scmp.eq.s32.totalorder %s28, 1
      %p100 = por %p98, %p99
      %p102 = scmp.ne.s32.totalorder %s85, %s101
      %p103 = scmp.eq.s32.totalorder %s28, 0
      %p104 = por %p102, %p103
      %s105 = ssub.s32 %s29, %s48
      %s106 = ssub.s32 %s30, %s44
      %s107 = sor.u32 %s105, %s106
      %p108 = scmp.eq.s32.totalorder %s107, 0
      %s110 = sadd.s32 %s109, 1
      %s111 = scalar_select %p108, %s109, %s110
      %p114 = pneg %p108
      %p115 = scmp.eq.s32.totalorder %s22, 1
      %p116 = por %p114, %p115
      %p117 = scmp.ne.s32.totalorder %s109, %s112
      %p118 = scmp.eq.s32.totalorder %s22, 0
      %p119 = por %p117, %p118
      %p120 = scmp.ne.s32.totalorder %s109, %s112
      %p121 = scmp.eq.s32.totalorder %s27, 1
      %p122 = por %p120, %p121
      %p123 = scmp.ne.s32.totalorder %s112, %s113
      %p124 = scmp.eq.s32.totalorder %s27, 0
      %p125 = por %p123, %p124
      %p126 = scmp.ne.s32.totalorder %s112, %s113
      %p127 = scmp.eq.s32.totalorder %s28, 1
      %p128 = por %p126, %p127
      %p130 = scmp.ne.s32.totalorder %s113, %s129
      %p131 = scmp.eq.s32.totalorder %s28, 0
      %p132 = por %p130, %p131
      %s133 = ssub.s32 %s29, %s48
      %s134 = ssub.s32 %s30, %s44
      %s135 = sor.u32 %s133, %s134
      %p136 = scmp.eq.s32.totalorder %s135, 0
      %s138 = sadd.s32 %s137, 1
      %s139 = scalar_select %p136, %s137, %s138
      %p142 = pneg %p136
      %p143 = scmp.eq.s32.totalorder %s22, 1
      %p144 = por %p142, %p143
      %p145 = scmp.ne.s32.totalorder %s137, %s140
      %p146 = scmp.eq.s32.totalorder %s22, 0
      %p147 = por %p145, %p146
      %p148 = scmp.ne.s32.totalorder %s137, %s140
      %p149 = scmp.eq.s32.totalorder %s27, 1
      %p150 = por %p148, %p149
      %p151 = scmp.ne.s32.totalorder %s140, %s141
      %p152 = scmp.eq.s32.totalorder %s27, 0
      %p153 = por %p151, %p152
      %p154 = scmp.ne.s32.totalorder %s140, %s141
      %p155 = scmp.eq.s32.totalorder %s28, 1
      %p156 = por %p154, %p155
      %p158 = scmp.ne.s32.totalorder %s141, %s157
      %p159 = scmp.eq.s32.totalorder %s28, 0
      %p160 = por %p158, %p159
      %p161 = scmp.le.s32.totalorder 1, %s22
      %p162 = scmp.lt.s32.totalorder %s22, 3
      %p163 = pnand %p161, %p162
      %p164 = pneg %p163
      // Predicated region
      $region9: #{tpu_custom_call.1} parent=5 // pred_check
        _
      $region10: #{tpu_custom_call.1} parent=5 // pred_check_branch
        %166 = sbr.rel (%p163) target = $region12
      $region11: #{tpu_custom_call.1} parent=5 // pred_region
        %s167 = ssub.s32 %s22, 1
      $region12: #{tpu_custom_call.1} parent=5 // pred_fallthru
        _
      %p168 = scmp.lt.s32.totalorder %s22, 2
      // Predicated region
      $region13: #{tpu_custom_call.1} parent=5 // pred_check
        %p169 = pneg %p168
      $region14: #{tpu_custom_call.1} parent=5 // pred_check_branch
        %171 = sbr.rel (%p169) target = $region16
      $region15: #{tpu_custom_call.1} parent=5 // pred_region
        // Predicated region
        $region17: #{tpu_custom_call.1} parent=15 // pred_check
          %p172 = pneg %p63
        $region18: #{tpu_custom_call.1} parent=15 // pred_check_branch
          %174 = sbr.rel (%p172) target = $region20
        $region19: #{tpu_custom_call.1} parent=15 // pred_region
          %s175 = sand.u32 %s53, 1
          %s176 = scalar_lea.sflag [#allocation5], %s175
          %s177 = sand.u32 %s53, 1
          %s178 = smul.addr %s177, 8
          %s179 = scalar_lea.vmem [#allocation4], %s178
          %s181 = ssub.s32 128, 128
          %182 = vsyncadd %s176, %s181
          %s183 = sadd.s32 %s31, %s29
          %s184 = smul.addr %s183, 128
          %s185 = scalar_lea.hbm %s0, %s184
          %s187 = sshll.u32 %s179, 4
          %s188 = int_to_ptr.vmem [resolvable:$true] %s187
          %190 = dma.hbm_to_vmem [thread:$0]  %s185, 128, %s188, %s176
        $region20: #{tpu_custom_call.1} parent=15 // pred_fallthru
          _
        // Predicated region
        $region21: #{tpu_custom_call.1} parent=15 // pred_check
          %p191 = pneg %p91
        $region22: #{tpu_custom_call.1} parent=15 // pred_check_branch
          %193 = sbr.rel (%p191) target = $region24
        $region23: #{tpu_custom_call.1} parent=15 // pred_region
          %s194 = sand.u32 %s81, 1
          %s195 = scalar_lea.sflag [#allocation8], %s194
          %s196 = sand.u32 %s81, 1
          %s197 = smul.addr %s196, 8
          %s198 = scalar_lea.vmem [#allocation7], %s197
          %s200 = ssub.s32 128, 128
          %201 = vsyncadd %s195, %s200
          %s202 = sadd.s32 %s31, %s29
          %s203 = smul.addr %s202, 128
          %s204 = scalar_lea.hbm %s1, %s203
          %s206 = sshll.u32 %s198, 4
          %s207 = int_to_ptr.vmem [resolvable:$true] %s206
          %209 = dma.hbm_to_vmem [thread:$0]  %s204, 128, %s207, %s195
        $region24: #{tpu_custom_call.1} parent=15 // pred_fallthru
          _
      $region16: #{tpu_custom_call.1} parent=5 // pred_fallthru
        _
      %p210 = scmp.le.s32.totalorder 1, %s22
      %p211 = scmp.lt.s32.totalorder %s22, 3
      %p212 = pnand %p210, %p211
      %p213 = pneg %p212
      // Predicated region
      $region25: #{tpu_custom_call.1} parent=5 // pred_check
        _
      $region26: #{tpu_custom_call.1} parent=5 // pred_check_branch
        %215 = sbr.rel (%p212) target = $region28
      $region27: #{tpu_custom_call.1} parent=5 // pred_region
        %s216 = ssub.s32 %s22, 1
        %s217 = sand.u32 %s56, 1
        %s218 = scalar_lea.sflag [#allocation5], %s217
        %s219 = sand.u32 %s56, 1
        %s220 = smul.addr %s219, 8
        %s221 = scalar_lea.vmem [#allocation4], %s220
        // Predicated region
        $region29: #{tpu_custom_call.1} parent=27 // pred_check
          %p222 = pneg %p69
        $region30: #{tpu_custom_call.1} parent=27 // pred_check_branch
          %224 = sbr.rel (%p222) target = $region32
        $region31: #{tpu_custom_call.1} parent=27 // pred_region
          %225 = dma.done %s218, 128
        $region32: #{tpu_custom_call.1} parent=27 // pred_fallthru
          _
        %s226 = sand.u32 %s84, 1
        %s227 = scalar_lea.sflag [#allocation8], %s226
        %s228 = sand.u32 %s84, 1
        %s229 = smul.addr %s228, 8
        %s230 = scalar_lea.vmem [#allocation7], %s229
        // Predicated region
        $region33: #{tpu_custom_call.1} parent=27 // pred_check
          %p231 = pneg %p97
        $region34: #{tpu_custom_call.1} parent=27 // pred_check_branch
          %233 = sbr.rel (%p231) target = $region36
        $region35: #{tpu_custom_call.1} parent=27 // pred_region
          %234 = dma.done %s227, 128
        $region36: #{tpu_custom_call.1} parent=27 // pred_fallthru
          _
        %s235 = sand.u32 %s56, 1
        %s236 = scalar_lea.sflag [#allocation5], %s235
        %s237 = sand.u32 %s56, 1
        %s238 = smul.addr %s237, 8
        %s239 = scalar_lea.vmem [#allocation4], %s238
        %p240 = pneg %p69
        %p241 = pneg %p66
        %s242 = sand.u32 %s84, 1
        %s243 = scalar_lea.sflag [#allocation8], %s242
        %s244 = sand.u32 %s84, 1
        %s245 = smul.addr %s244, 8
        %s246 = scalar_lea.vmem [#allocation7], %s245
        %p247 = pneg %p97
        %p248 = pneg %p94
        %p249 = pneg %p125
        %p250 = pneg %p122
        %s251 = sand.u32 %s112, 1
        %s252 = scalar_lea.sflag [#allocation6], %s251
        %s253 = sand.u32 %s112, 1
        %s254 = scalar_lea.vmem [#allocation9], %s253
        %p255 = pneg %p153
        %p256 = pneg %p150
        %s257 = sand.u32 %s140, 1
        %s258 = scalar_lea.sflag [#allocation11], %s257
        %s259 = sand.u32 %s140, 1
        %s260 = scalar_lea.vmem [#allocation10], %s259
        %p261 = scmp.eq.s32.totalorder %s34, 0
        // Predicated region
        $region37: #{tpu_custom_call.1} parent=27 // pred_check
          %p262 = pneg %p261
        $region38: #{tpu_custom_call.1} parent=27 // pred_check_branch
          %264 = sbr.rel (%p262) target = $region40
        $region39: #{tpu_custom_call.1} parent=27 // pred_region
          %265 = vst [vmem:[#allocation2] sm:$0x1] 0.0
          %266 = vst [vmem:[#allocation3] sm:$0x1] 0.0
        $region40: #{tpu_custom_call.1} parent=27 // pred_fallthru
          _
        %v267 = vld [vmem:[%s221] sm:$0xff]
        %v268 = vld [vmem:[%s230] sm:$0xff]
        %v269 = vld [vmem:[#allocation2] sm:$0x1]
        %v270 = vmul.f32 %v267, %v268
        %v271 = vrot.slane %v270, 4
        %v272 = vadd.f32 %v270, %v271
        %v273 = vrot.slane %v272, 2
        %v274 = vadd.f32 %v272, %v273
        %v275 = vrot.slane %v274, 1
        %v276 = vadd.f32 %v274, %v275
        %v277 = vadd.f32 %v269, %v276
        %278 = vst [vmem:[#allocation2] sm:$0x1] %v277
        %v279 = vld [vmem:[#allocation3] sm:$0x1]
        %v280 = vmul.f32 %v267, %v267
        %v281 = vmul.f32 %v268, %v268
        %v282 = vadd.f32 %v280, %v281
        %v283 = vrot.slane %v282, 4
        %v284 = vadd.f32 %v282, %v283
        %v285 = vrot.slane %v284, 2
        %v286 = vadd.f32 %v284, %v285
        %v287 = vrot.slane %v286, 1
        %v288 = vadd.f32 %v286, %v287
        %v289 = vadd.f32 %v279, %v288
        %290 = vst [vmem:[#allocation3] sm:$0x1] %v289
        // Predicated region
        $region41: #{tpu_custom_call.1} parent=27 // pred_check
          %p291 = pneg %p261
        $region42: #{tpu_custom_call.1} parent=27 // pred_check_branch
          %293 = sbr.rel (%p291) target = $region44
        $region43: #{tpu_custom_call.1} parent=27 // pred_region
          %v294 = vld [vmem:[#allocation2] sm:$0x1]
          %295 = vst [vmem:[%s254] sm:$0x1] %v294
          %v296 = vld [vmem:[#allocation3] sm:$0x1]
          %297 = vst [vmem:[%s260] sm:$0x1] %v296
        $region44: #{tpu_custom_call.1} parent=27 // pred_fallthru
          _
        %s298 = sand.u32 %s112, 1
        %s299 = scalar_lea.sflag [#allocation6], %s298
        %s300 = sand.u32 %s112, 1
        %s301 = scalar_lea.vmem [#allocation9], %s300
        %s302 = sand.u32 %s140, 1
        %s303 = scalar_lea.sflag [#allocation11], %s302
        %s304 = sand.u32 %s140, 1
        %s305 = scalar_lea.vmem [#allocation10], %s304
        // Predicated region
        $region45: #{tpu_custom_call.1} parent=27 // pred_check
          %p306 = pneg %p122
        $region46: #{tpu_custom_call.1} parent=27 // pred_check_branch
          %308 = sbr.rel (%p306) target = $region48
        $region47: #{tpu_custom_call.1} parent=27 // pred_region
          %s310 = ssub.s32 16, 16
          %311 = vsyncadd %s299, %s310
          %s312 = sadd.s32 %s33, %s32
          %s313 = smul.addr %s312, 16
          %s314 = scalar_lea.hbm %s2, %s313
          %s316 = sshll.u32 %s301, 4
          %s317 = int_to_ptr.vmem [resolvable:$true] %s316
          %319 = dma.vmem_to_hbm [thread:$0]  %s317, 16, %s314, %s299
        $region48: #{tpu_custom_call.1} parent=27 // pred_fallthru
          _
        // Predicated region
        $region49: #{tpu_custom_call.1} parent=27 // pred_check
          %p320 = pneg %p150
        $region50: #{tpu_custom_call.1} parent=27 // pred_check_branch
          %322 = sbr.rel (%p320) target = $region52
        $region51: #{tpu_custom_call.1} parent=27 // pred_region
          %s324 = ssub.s32 16, 16
          %325 = vsyncadd %s303, %s324
          %s326 = sadd.s32 %s33, %s32
          %s327 = smul.addr %s326, 16
          %s328 = scalar_lea.hbm %s3, %s327
          %s330 = sshll.u32 %s305, 4
          %s331 = int_to_ptr.vmem [resolvable:$true] %s330
          %333 = dma.vmem_to_hbm [thread:$0]  %s331, 16, %s328, %s303
        $region52: #{tpu_custom_call.1} parent=27 // pred_fallthru
          _
      $region28: #{tpu_custom_call.1} parent=5 // pred_fallthru
        _
      %p334 = scmp.le.s32.totalorder 2, %s22
      // Predicated region
      $region53: #{tpu_custom_call.1} parent=5 // pred_check
        %p335 = pneg %p334
      $region54: #{tpu_custom_call.1} parent=5 // pred_check_branch
        %337 = sbr.rel (%p335) target = $region56
      $region55: #{tpu_custom_call.1} parent=5 // pred_region
        %s338 = ssub.s32 %s22, 2
        // Predicated region
        $region57: #{tpu_custom_call.1} parent=55 // pred_check
          %p339 = pneg %p128
        $region58: #{tpu_custom_call.1} parent=55 // pred_check_branch
          %341 = sbr.rel (%p339) target = $region60
        $region59: #{tpu_custom_call.1} parent=55 // pred_region
          %s342 = sand.u32 %s113, 1
          %s343 = scalar_lea.sflag [#allocation6], %s342
          %s344 = sand.u32 %s113, 1
          %s345 = scalar_lea.vmem [#allocation9], %s344
          %346 = dma.done %s343, 16
        $region60: #{tpu_custom_call.1} parent=55 // pred_fallthru
          _
        // Predicated region
        $region61: #{tpu_custom_call.1} parent=55 // pred_check
          %p347 = pneg %p156
        $region62: #{tpu_custom_call.1} parent=55 // pred_check_branch
          %349 = sbr.rel (%p347) target = $region64
        $region63: #{tpu_custom_call.1} parent=55 // pred_region
          %s350 = sand.u32 %s141, 1
          %s351 = scalar_lea.sflag [#allocation11], %s350
          %s352 = sand.u32 %s141, 1
          %s353 = scalar_lea.vmem [#allocation10], %s352
          %354 = dma.done %s351, 16
        $region64: #{tpu_custom_call.1} parent=55 // pred_fallthru
          _
      $region56: #{tpu_custom_call.1} parent=5 // pred_fallthru
        _
    $region6: #{tpu_custom_call.1} parent=1 // loop_footer
      %s26 = sadd.s32 1, %s22
    $region7: #{tpu_custom_call.1} parent=1 // loop_footer_branch
      %21 = sbr.rel target = $region3
    $region8: #{tpu_custom_call.1} parent=1 // loop_exit
      _
    %355 = vsyncpa [#allocation5], 1
    %s356 = scalar_lea.sflag [#allocation5], 1
    %357 = vsyncpa %s356, 1
    %358 = vsyncpa [#allocation8], 1
    %s359 = scalar_lea.sflag [#allocation8], 1
    %360 = vsyncpa %s359, 1
    %361 = vsyncpa [#allocation6], 1
    %s362 = scalar_lea.sflag [#allocation6], 1
    %363 = vsyncpa %s362, 1
    %364 = vsyncpa [#allocation11], 1
    %s365 = scalar_lea.sflag [#allocation11], 1
    %366 = vsyncpa %s365, 1

</llo_original>
